<compile_context>
chip_gen: v7x
topology: tpu7x:2x2x1
jax: 0.10.0
libtpu: 0.0.40
codegen_flags: <defaults>
</compile_context>

<pallas_src>
import functools

import jax
import jax.numpy as jnp
from jax.experimental import pallas as pl
from jax.experimental.pallas import tpu as pltpu

_MIB = 1024 * 1024


def _attention_kernel(x_q_ref, x_kv_ref, w_ref, b_ref, o_ref, kt_ref, v_ref,
                      *, hidden):
    """One (batch, query-tile) grid step.

    x_q_ref : (1, TQ, F)  bf16  query rows owned by this step
    x_kv_ref: (1, S,  F)  bf16  full sequence for this batch (DMA'd once per b)
    w_ref   : (F, 3*HP)   bf16  fused, 128-aligned [Wq | Wk | Wv] (zero padded)
    b_ref   : (1, 3*HP)   f32   fused, 128-aligned [bq | bk | bv] (zero padded)
    o_ref   : (1, TQ, HP) f32   lane-dense padded output tile
    kt_ref  : (HP, S)     bf16  scratch: cached K^T for the current batch
    v_ref   : (S, HP)     bf16  scratch: cached V  for the current batch
    """
    hp = o_ref.shape[-1]
    qi = pl.program_id(1)

    # ---- K/V projection: once per batch element (qi axis is "arbitrary"). ----
    @pl.when(qi == 0)
    def _fill_kv():
        xs = x_kv_ref[0]                                             # (S, F) bf16
        kv = jnp.dot(xs, w_ref[:, hp:], preferred_element_type=jnp.float32)
        kv = kv + b_ref[:, hp:]                                      # (S, 2HP) f32
        kt_ref[...] = kv[:, :hp].T.astype(jnp.bfloat16)              # K^T (HP, S)
        v_ref[...] = kv[:, hp:].astype(jnp.bfloat16)                 # V   (S, HP)

    # ---- Q projection for this tile only. ----
    xq = x_q_ref[0]                                                  # (TQ, F) bf16
    q = jnp.dot(xq, w_ref[:, :hp], preferred_element_type=jnp.float32)
    q = q + b_ref[:, :hp]                                            # (TQ, HP) f32
    # Fold 1/sqrt(H) into q (H = true head dim, not the padded HP).
    q_bf = (q * (1.0 / float(hidden) ** 0.5)).astype(jnp.bfloat16)

    # scores = (q / sqrt(H)) @ K^T — plain MXU matmul against the cached K^T.
    scores = jnp.dot(q_bf, kt_ref[...], preferred_element_type=jnp.float32)

    # Numerically-stable softmax; VPU/EUP math stays f32 (v5e-safe).
    m = jnp.max(scores, axis=-1, keepdims=True)
    e = jnp.exp(scores - m)
    denom = jnp.sum(e, axis=-1, keepdims=True)
    probs = e * pl.reciprocal(denom, approx=True)                    # EUP slot

    out = jnp.dot(probs.astype(jnp.bfloat16), v_ref[...],
                  preferred_element_type=jnp.float32)                # (TQ, HP)
    o_ref[0] = out.astype(o_ref.dtype)


def _vmem_capacity_bytes():
    """Physical VMEM per core; conservative 64 MiB default if the query fails."""
    try:
        return int(getattr(pltpu.get_tpu_info(), "vmem_capacity_bytes", 64 * _MIB))
    except Exception:  # query-only fallback; never masks kernel lowering errors
        return 64 * _MIB


def _footprint_bytes(S, TQ, F, HP):
    """Double-buffered pipeline blocks + persistent scratch + live intermediates."""
    bf16, f32 = 2, 4
    pipelined = (2 * TQ * F * bf16            # x query tile (double buffered)
                 + 2 * S * F * bf16           # full-seq x block for the K/V fill
                 + 2 * F * 3 * HP * bf16      # fused padded weight
                 + 2 * 3 * HP * f32           # fused padded bias
                 + 2 * TQ * HP * f32)         # output tile
    scratch = 2 * S * HP * bf16               # cached K^T + V
    live = (S * 2 * HP * f32                  # K/V f32 accumulate at qi == 0
            + TQ * HP * (f32 + bf16)          # q (f32) + scaled bf16 q
            + 2 * TQ * S * f32                # scores + exp
            + TQ * S * bf16                   # bf16 probs for the PV matmul
            + TQ * HP * f32)                  # output accumulate
    return pipelined + scratch + live


def attention_forward(x, wq, bq, wk, bk, wv, bv):
    """x: (B, S, F) f32; w*: (F, H) f32; b*: (1, H) f32 -> (B, S, H) f32."""
    B, S, F = x.shape
    H = wq.shape[1]
    HP = ((H + 127) // 128) * 128             # 128-lane-aligned padded head dim

    def pad_cols(a):
        return jnp.pad(a, ((0, 0), (0, HP - H)))

    # Fuse + zero-pad the three projections so each segment is lane-aligned.
    w_qkv = jnp.concatenate([pad_cols(wq), pad_cols(wk), pad_cols(wv)],
                            axis=1).astype(jnp.bfloat16)             # (F, 3HP)
    b_qkv = jnp.concatenate([pad_cols(bq), pad_cols(bk), pad_cols(bv)],
                            axis=1).astype(jnp.float32)              # (1, 3HP)
    x_bf = x.astype(jnp.bfloat16)

    # Generation-aware VMEM budget: ~100 MiB on 128-MiB parts (v5e/v6e),
    # <= 48 MiB on 64-MiB parts (v7x).
    budget = min(_vmem_capacity_bytes() - 16 * _MIB, 100 * _MIB)

    # Largest query tile whose footprint fits the budget.
    if S <= 512:
        tq_cands = [S]
    else:
        tq_cands = [c for c in (512, 256, 128) if S % c == 0] or [S]
    TQ = next((c for c in tq_cands if _footprint_bytes(S, c, F, HP) <= budget),
              tq_cands[-1])
    NQ = S // TQ

    vmem_limit = int(min(budget,
                         max(2 * _footprint_bytes(S, TQ, F, HP), 16 * _MIB)))

    x_q_spec = pl.BlockSpec((1, TQ, F), lambda b, q: (b, q, 0))
    # Full-sequence block used only by the per-batch K/V fill; its block index
    # changes only with b, so it is DMA'd once per batch element.
    x_kv_spec = pl.BlockSpec((1, S, F), lambda b, q: (b, 0, 0))
    w_spec = pl.BlockSpec((F, 3 * HP), lambda b, q: (0, 0))
    bias_spec = pl.BlockSpec((1, 3 * HP), lambda b, q: (0, 0))
    o_spec = pl.BlockSpec((1, TQ, HP), lambda b, q: (b, q, 0))

    out_padded = pl.pallas_call(
        functools.partial(_attention_kernel, hidden=H),
        out_shape=jax.ShapeDtypeStruct((B, S, HP), jnp.float32),
        grid_spec=pltpu.PrefetchScalarGridSpec(
            num_scalar_prefetch=0,
            grid=(B, NQ),
            in_specs=[x_q_spec, x_kv_spec, w_spec, bias_spec],
            out_specs=o_spec,
            scratch_shapes=[pltpu.VMEM((HP, S), jnp.bfloat16),   # K^T cache
                            pltpu.VMEM((S, HP), jnp.bfloat16)],  # V cache
        ),
        compiler_params=pltpu.CompilerParams(
            # B parallel (megacore sharding); qi arbitrary so the per-core K/V
            # scratch reuse across query tiles of one batch element stays legal.
            dimension_semantics=("parallel", "arbitrary"),
            vmem_limit_bytes=vmem_limit,
        ),
    )(x_bf, x_bf, w_qkv, b_qkv)

    # Drop the zero-padded head columns (cheap slice of a contiguous slab).
    return out_padded[:, :, :H]


def _reference(x, wq, bq, wk, bk, wv, bv):
    q = x @ wq + bq
    k = x @ wk + bk
    v = x @ wv + bv
    scores = jnp.einsum("bqd,bkd->bqk", q, k) / jnp.sqrt(jnp.float32(q.shape[-1]))
    w = jax.nn.softmax(scores, axis=-1)
    return jnp.einsum("bqk,bkd->bqd", w, v)


if __name__ == "__main__":
    # Small shapes consistent with the module: x of shape (B, S, in_features).
    batch, seq, in_features, hidden_dim = 2, 8, 32, 32

    key = jax.random.PRNGKey(0)
    kx, kq, kbq, kk, kbk, kv, kbv = jax.random.split(key, 7)

    x = jax.random.normal(kx, (batch, seq, in_features), dtype=jnp.float32)

    # Deterministic parameter init (PyTorch-Linear-like uniform fan-in scale).
    bound = 1.0 / jnp.sqrt(jnp.float32(in_features))
    wq = jax.random.uniform(kq, (in_features, hidden_dim), jnp.float32, -bound, bound)
    bq = jax.random.uniform(kbq, (1, hidden_dim), jnp.float32, -bound, bound)
    wk = jax.random.uniform(kk, (in_features, hidden_dim), jnp.float32, -bound, bound)
    bk = jax.random.uniform(kbk, (1, hidden_dim), jnp.float32, -bound, bound)
    wv = jax.random.uniform(kv, (in_features, hidden_dim), jnp.float32, -bound, bound)
    bv = jax.random.uniform(kbv, (1, hidden_dim), jnp.float32, -bound, bound)

    out = attention_forward(x, wq, bq, wk, bk, wv, bv)
    out = jax.block_until_ready(out)

    ref = _reference(x, wq, bq, wk, bk, wv, bv)
    assert out.shape == (batch, seq, hidden_dim)
    # bf16 MXU operands (f32 accumulate + f32 softmax, approx reciprocal)
    # => ~1e-2 relative accuracy vs. the f32 reference (documented contract).
    assert jnp.allclose(out, ref, atol=2e-2, rtol=2e-2), "mismatch vs reference"

    print("KERNEL_OK")
</pallas_src>

<mosaic_0001>
module attributes {stable_mosaic.version = 11 : i64} {
  func.func @_attention_kernel(%arg0: i32, %arg1: i32, %arg2: memref<1x8x32xbf16, #tpu.memory_space<vmem>>, %arg3: memref<1x8x32xbf16, #tpu.memory_space<vmem>>, %arg4: memref<32x384xbf16, #tpu.memory_space<vmem>>, %arg5: memref<1x384xf32, #tpu.memory_space<vmem>>, %arg6: memref<1x8x128xf32, #tpu.memory_space<vmem>>, %arg7: memref<128x8xbf16, #tpu.memory_space<vmem>>, %arg8: memref<8x128xbf16, #tpu.memory_space<vmem>>) attributes {dimension_semantics = [#tpu.dimension_semantics<parallel>, #tpu.dimension_semantics<arbitrary>], iteration_bounds = array<i64: 2, 1>, scalar_prefetch = 0 : i64, scratch_operands = 2 : i64, tpu.core_type = #tpu.core_type<tc>, window_params = [{transform_indices = @transform_0, window_bounds = array<i64: 1, 8, 32>}, {transform_indices = @transform_1, window_bounds = array<i64: 1, 8, 32>}, {pipeline_mode = #tpu.pipeline_mode<synchronous>, transform_indices = @transform_2, window_bounds = array<i64: 32, 384>}, {pipeline_mode = #tpu.pipeline_mode<synchronous>, transform_indices = @transform_3, window_bounds = array<i64: 1, 384>}, {transform_indices = @transform_4, window_bounds = array<i64: 1, 8, 128>}]} {
    %c0_i32 = arith.constant 0 : i32
    %0 = arith.cmpi eq, %arg1, %c0_i32 : i32
    %1 = arith.extui %0 : i1 to i32
    %c0_i32_0 = arith.constant 0 : i32
    %2 = arith.cmpi ne, %1, %c0_i32_0 : i32
    scf.if %2 {
      %c0_19 = arith.constant 0 : index
      %c0_20 = arith.constant 0 : index
      %c0_21 = arith.constant 0 : index
      %31 = vector.load %arg3[%c0_19, %c0_20, %c0_21] : memref<1x8x32xbf16, #tpu.memory_space<vmem>>, vector<1x8x32xbf16>
      %32 = vector.shape_cast %31 : vector<1x8x32xbf16> to vector<8x32xbf16>
      %c0_22 = arith.constant 0 : index
      %c128 = arith.constant 128 : index
      %33 = vector.load %arg4[%c0_22, %c128] : memref<32x384xbf16, #tpu.memory_space<vmem>>, vector<32x256xbf16>
      %cst_23 = arith.constant dense<0.000000e+00> : vector<8x256xf32>
      %34 = tpu.matmul %32, %33, %cst_23 {dimension_numbers = #tpu.dot_dimension_numbers<[1], [0], [0], [1], [0, 0, 1, 1], [], []>} : vector<8x32xbf16>, vector<32x256xbf16>, vector<8x256xf32> -> vector<8x256xf32>
      %c0_24 = arith.constant 0 : index
      %c128_25 = arith.constant 128 : index
      %35 = vector.load %arg5[%c0_24, %c128_25] : memref<1x384xf32, #tpu.memory_space<vmem>>, vector<1x256xf32>
      %36 = vector.broadcast %35 : vector<1x256xf32> to vector<8x256xf32>
      %37 = arith.addf %34, %36 : vector<8x256xf32>
      %38 = vector.extract_strided_slice %37 {offsets = [0, 0], sizes = [8, 128], strides = [1, 1]} : vector<8x256xf32> to vector<8x128xf32>
      %39 = tpu.transpose %38, [1, 0] : vector<8x128xf32> -> vector<128x8xf32>
      %40 = arith.truncf %39 : vector<128x8xf32> to vector<128x8xbf16>
      %c0_26 = arith.constant 0 : index
      %c0_27 = arith.constant 0 : index
      %41 = vector.load %arg7[%c0_26, %c0_27] : memref<128x8xbf16, #tpu.memory_space<vmem>>, vector<128x8xbf16>
      tpu.vector_store %arg7[%c0_26, %c0_27], %40 {strides = array<i32>} : memref<128x8xbf16, #tpu.memory_space<vmem>>, vector<128x8xbf16>,
      %42 = vector.extract_strided_slice %37 {offsets = [0, 128], sizes = [8, 128], strides = [1, 1]} : vector<8x256xf32> to vector<8x128xf32>
      %43 = arith.truncf %42 : vector<8x128xf32> to vector<8x128xbf16>
      %c0_28 = arith.constant 0 : index
      %c0_29 = arith.constant 0 : index
      %44 = vector.load %arg8[%c0_28, %c0_29] : memref<8x128xbf16, #tpu.memory_space<vmem>>, vector<8x128xbf16>
      tpu.vector_store %arg8[%c0_28, %c0_29], %43 {strides = array<i32>} : memref<8x128xbf16, #tpu.memory_space<vmem>>, vector<8x128xbf16>,
    } else {
    }
    %c0 = arith.constant 0 : index
    %c0_1 = arith.constant 0 : index
    %c0_2 = arith.constant 0 : index
    %3 = vector.load %arg2[%c0, %c0_1, %c0_2] : memref<1x8x32xbf16, #tpu.memory_space<vmem>>, vector<1x8x32xbf16>
    %4 = vector.shape_cast %3 : vector<1x8x32xbf16> to vector<8x32xbf16>
    %c0_3 = arith.constant 0 : index
    %c0_4 = arith.constant 0 : index
    %5 = vector.load %arg4[%c0_3, %c0_4] : memref<32x384xbf16, #tpu.memory_space<vmem>>, vector<32x128xbf16>
    %cst = arith.constant dense<0.000000e+00> : vector<8x128xf32>
    %6 = tpu.matmul %4, %5, %cst {dimension_numbers = #tpu.dot_dimension_numbers<[1], [0], [0], [1], [0, 0, 1, 1], [], []>} : vector<8x32xbf16>, vector<32x128xbf16>, vector<8x128xf32> -> vector<8x128xf32>
    %c0_5 = arith.constant 0 : index
    %c0_6 = arith.constant 0 : index
    %7 = vector.load %arg5[%c0_5, %c0_6] : memref<1x384xf32, #tpu.memory_space<vmem>>, vector<1x128xf32>
    %8 = vector.broadcast %7 : vector<1x128xf32> to vector<8x128xf32>
    %9 = arith.addf %6, %8 : vector<8x128xf32>
    %cst_7 = arith.constant 0.176776692 : f32
    %10 = vector.broadcast %cst_7 : f32 to vector<8x128xf32>
    %11 = arith.mulf %9, %10 : vector<8x128xf32>
    %12 = arith.truncf %11 : vector<8x128xf32> to vector<8x128xbf16>
    %c0_8 = arith.constant 0 : index
    %c0_9 = arith.constant 0 : index
    %13 = vector.load %arg7[%c0_8, %c0_9] : memref<128x8xbf16, #tpu.memory_space<vmem>>, vector<128x8xbf16>
    %cst_10 = arith.constant dense<0.000000e+00> : vector<8x8xf32>
    %14 = tpu.matmul %12, %13, %cst_10 {dimension_numbers = #tpu.dot_dimension_numbers<[1], [0], [0], [1], [0, 0, 1, 1], [], []>} : vector<8x128xbf16>, vector<128x8xbf16>, vector<8x8xf32> -> vector<8x8xf32>
    %cst_11 = arith.constant dense<0xFF800000> : vector<8xf32>
    %15 = vector.multi_reduction <maximumf>, %14, %cst_11 [1] : vector<8x8xf32> to vector<8xf32>
    %16 = vector.shape_cast %15 : vector<8xf32> to vector<8x1xf32>
    %17 = vector.broadcast %16 : vector<8x1xf32> to vector<8x8xf32>
    %18 = arith.subf %14, %17 : vector<8x8xf32>
    %19 = math.exp %18 : vector<8x8xf32>
    %cst_12 = arith.constant dense<0.000000e+00> : vector<8xf32>
    %20 = vector.multi_reduction <add>, %19, %cst_12 [1] : vector<8x8xf32> to vector<8xf32>
    %21 = vector.shape_cast %20 : vector<8xf32> to vector<8x1xf32>
    %22 = tpu.reciprocal %21 {approx = true} : vector<8x1xf32> -> vector<8x1xf32>
    %23 = vector.broadcast %22 : vector<8x1xf32> to vector<8x8xf32>
    %24 = arith.mulf %19, %23 : vector<8x8xf32>
    %25 = arith.truncf %24 : vector<8x8xf32> to vector<8x8xbf16>
    %c0_13 = arith.constant 0 : index
    %c0_14 = arith.constant 0 : index
    %26 = vector.load %arg8[%c0_13, %c0_14] : memref<8x128xbf16, #tpu.memory_space<vmem>>, vector<8x128xbf16>
    %cst_15 = arith.constant dense<0.000000e+00> : vector<8x128xf32>
    %27 = tpu.matmul %25, %26, %cst_15 {dimension_numbers = #tpu.dot_dimension_numbers<[1], [0], [0], [1], [0, 0, 1, 1], [], []>} : vector<8x8xbf16>, vector<8x128xbf16>, vector<8x128xf32> -> vector<8x128xf32>
    %c0_16 = arith.constant 0 : index
    %c0_17 = arith.constant 0 : index
    %c0_18 = arith.constant 0 : index
    %28 = vector.load %arg6[%c0_16, %c0_17, %c0_18] : memref<1x8x128xf32, #tpu.memory_space<vmem>>, vector<1x8x128xf32>
    %29 = vector.shape_cast %28 : vector<1x8x128xf32> to vector<8x128xf32>
    %30 = vector.shape_cast %27 : vector<8x128xf32> to vector<1x8x128xf32>
    tpu.vector_store %arg6[%c0_16, %c0_17, %c0_18], %30 {strides = array<i32>} : memref<1x8x128xf32, #tpu.memory_space<vmem>>, vector<1x8x128xf32>,
    return
  }
  func.func @transform_0(%arg0: i32, %arg1: i32) -> (i32, i32, i32) {
    %c0_i32 = arith.constant 0 : i32
    %c0_i32_0 = arith.constant 0 : i32
    return %arg0, %arg1, %c0_i32 : i32, i32, i32
  }
  func.func @transform_1(%arg0: i32, %arg1: i32) -> (i32, i32, i32) {
    %c0_i32 = arith.constant 0 : i32
    %c0_i32_0 = arith.constant 0 : i32
    %c0_i32_1 = arith.constant 0 : i32
    return %arg0, %c0_i32, %c0_i32_0 : i32, i32, i32
  }
  func.func @transform_2(%arg0: i32, %arg1: i32) -> (i32, i32) {
    %c0_i32 = arith.constant 0 : i32
    %c0_i32_0 = arith.constant 0 : i32
    %c0_i32_1 = arith.constant 0 : i32
    return %c0_i32, %c0_i32_0 : i32, i32
  }
  func.func @transform_3(%arg0: i32, %arg1: i32) -> (i32, i32) {
    %c0_i32 = arith.constant 0 : i32
    %c0_i32_0 = arith.constant 0 : i32
    %c0_i32_1 = arith.constant 0 : i32
    return %c0_i32, %c0_i32_0 : i32, i32
  }
  func.func @transform_4(%arg0: i32, %arg1: i32) -> (i32, i32, i32) {
    %c0_i32 = arith.constant 0 : i32
    %c0_i32_0 = arith.constant 0 : i32
    return %arg0, %arg1, %c0_i32 : i32, i32, i32
  }
}

</mosaic_0001>

<llo_original>
// kernel: tpu_custom_call.1
$region0: #{tpu_custom_call.1}
  #allocation0 [shape = 'u32[]', space=smem, size = 0x4, offset = 0x4, fixed_abs, tag = 'smem constant byte address 0x4 - core index']
  #allocation1 [shape = 'u32[144,128]{1,0:T(1,128)}', space=vmem, size = 0x12000, scoped, tag = 'internal scratch']
  #allocation2 [shape = 'bf16[128,8]{1,0:T(16,128)(2,1)}', space=vmem, size = 0x8000, scoped, tag = 'scratch operand']
  #allocation3 [shape = 'bf16[8,128]{1,0:T(8,128)(2,1)}', space=vmem, size = 0x800, scoped, tag = 'scratch operand']
  %s0 = inlined_call_operand.hbm [shape: bf16[2,8,32], index: 0, kind: input, shape index: {}]
  %s1 = inlined_call_operand.hbm [shape: bf16[2,8,32], index: 1, kind: input, shape index: {}]
  %s2 = inlined_call_operand.hbm [shape: bf16[32,384], index: 2, kind: input, shape index: {}]
  %s3 = inlined_call_operand.vmem [shape: f32[1,384], index: 3, kind: input, shape index: {}]
  %s4 = inlined_call_operand.hbm [shape: f32[2,8,128], index: 4, kind: output, shape index: {}]
  %s5 = sld [smem:[#allocation0]]
  $region65: #{tpu_custom_call.1} parent=0
    _
  %s7 = ssub.s32 1, %s5
  %s8 = scalar_select 0, %s7, %s5
  $region1: #{tpu_custom_call.1} parent=0
    #allocation4 [shape = 'u8[4096]{0}', space=vmem, size = 0x1000, scoped, tag = 'input window, operand 0']
    #allocation5 [shape = 's32[2]{0}', space=sflag, size = 0x8, scoped, tag = 'scoped memory for tpu_custom_call.1']
    #allocation6 [shape = 's32[2]{0}', space=sflag, size = 0x8, scoped, tag = 'scoped memory for tpu_custom_call.1']
    #allocation7 [shape = 'u8[4096]{0}', space=vmem, size = 0x1000, scoped, tag = 'input window, operand 1']
    #allocation8 [shape = 's32[2]{0}', space=sflag, size = 0x8, scoped, tag = 'scoped memory for tpu_custom_call.1']
    #allocation9 [shape = 'u8[24576]{0}', space=vmem, size = 0x6000, scoped, tag = 'input window, operand 2, single buffered']
    #allocation10 [shape = 'u8[8192]{0}', space=vmem, size = 0x2000, scoped, tag = 'output window, operand 0']
    %9 = vsyncpa [#allocation5], 0
    %s10 = scalar_lea.sflag [#allocation5], 1
    %11 = vsyncpa %s10, 0
    %12 = vsyncpa [#allocation8], 0
    %s13 = scalar_lea.sflag [#allocation8], 1
    %14 = vsyncpa %s13, 0
    %15 = vsyncpa [#allocation6], 0
    %s16 = scalar_lea.sflag [#allocation6], 1
    %17 = vsyncpa %s16, 0
    loop: start=0, step=1, limit=4
    $region2: #{tpu_custom_call.1} parent=1 // loop_pre_header
      _
    $region3: #{tpu_custom_call.1} parent=1 // loop_header
      %s19 = sphi 0, %s23
      %p20 = scmp.ge.s32.totalorder %s19, 4
      %s26 = sphi 0, %s38
      %s27 = sphi 0, %s34
      %s28 = sphi 0, %s26
      %s29 = sphi 0, %s27
      %s30 = sphi 0, %s28
      %s31 = sphi 0, %s29
      %s43 = sphi 0, %s45
      %s46 = sphi 0, %s43
      %s47 = sphi 0, %s46
      %s63 = sphi 0, %s47
      %s69 = sphi 0, %s71
      %s72 = sphi 0, %s69
      %s73 = sphi 0, %s72
      %s89 = sphi 0, %s73
      %s93 = sphi 0, %s93
      %s95 = sphi 0, %s93
      %s96 = sphi 0, %s95
      %s110 = sphi 0, %s96
      %s114 = sphi 0, %s114
      %s116 = sphi 0, %s114
      %s117 = sphi 0, %s116
      %s131 = sphi 0, %s117
      %s139 = sphi 0, %s141
      %s142 = sphi 0, %s139
      %s143 = sphi 0, %s142
      %s159 = sphi 0, %s143
    $region4: #{tpu_custom_call.1} parent=1 // loop_header_branch
      %22 = sbr.rel (%p20) target = $region8
    $region5: #{tpu_custom_call.1} parent=1 // loop_body
      %s24 = ssub.s32 %s19, 1
      %s25 = ssub.s32 %s19, 2
      %s32 = sadd.s32 1, %s27
      %p33 = scmp.ge.s32.totalorder %s32, 1
      %s34 = scalar_select %p33, 0, %s32
      %s35 = sadd.s32 1, %s26
      %s36 = scalar_select %p33, %s35, %s26
      %p37 = scmp.ge.s32.totalorder %s36, 2
      %s38 = scalar_select %p37, 0, %s36
      %s39 = ssub.s32 %s26, %s38
      %s40 = ssub.s32 %s27, %s34
      %s41 = sor.u32 %s39, %s40
      %p42 = scmp.eq.s32.totalorder %s41, 0
      %s44 = sadd.s32 %s43, 1
      %s45 = scalar_select %p42, %s43, %s44
      %p48 = pneg %p42
      %p49 = scmp.eq.s32.totalorder %s19, 1
      %p50 = por %p48, %p49
      %p51 = scmp.ne.s32.totalorder %s43, %s46
      %p52 = scmp.eq.s32.totalorder %s19, 0
      %p53 = por %p51, %p52
      %p54 = scmp.ne.s32.totalorder %s43, %s46
      %p55 = scmp.eq.s32.totalorder %s24, 1
      %p56 = por %p54, %p55
      %p57 = scmp.ne.s32.totalorder %s46, %s47
      %p58 = scmp.eq.s32.totalorder %s24, 0
      %p59 = por %p57, %p58
      %p60 = scmp.ne.s32.totalorder %s46, %s47
      %p61 = scmp.eq.s32.totalorder %s25, 1
      %p62 = por %p60, %p61
      %p64 = scmp.ne.s32.totalorder %s47, %s63
      %p65 = scmp.eq.s32.totalorder %s25, 0
      %p66 = por %p64, %p65
      %s67 = ssub.s32 %s26, %s38
      %p68 = scmp.eq.s32.totalorder %s67, 0
      %s70 = sadd.s32 %s69, 1
      %s71 = scalar_select %p68, %s69, %s70
      %p74 = pneg %p68
      %p75 = scmp.eq.s32.totalorder %s19, 1
      %p76 = por %p74, %p75
      %p77 = scmp.ne.s32.totalorder %s69, %s72
      %p78 = scmp.eq.s32.totalorder %s19, 0
      %p79 = por %p77, %p78
      %p80 = scmp.ne.s32.totalorder %s69, %s72
      %p81 = scmp.eq.s32.totalorder %s24, 1
      %p82 = por %p80, %p81
      %p83 = scmp.ne.s32.totalorder %s72, %s73
      %p84 = scmp.eq.s32.totalorder %s24, 0
      %p85 = por %p83, %p84
      %p86 = scmp.ne.s32.totalorder %s72, %s73
      %p87 = scmp.eq.s32.totalorder %s25, 1
      %p88 = por %p86, %p87
      %p90 = scmp.ne.s32.totalorder %s73, %s89
      %p91 = scmp.eq.s32.totalorder %s25, 0
      %p92 = por %p90, %p91
      %s94 = sadd.s32 %s93, 1
      %p97 = scmp.eq.s32.totalorder %s19, 1
      %p98 = scmp.ne.s32.totalorder %s93, %s95
      %p99 = scmp.eq.s32.totalorder %s19, 0
      %p100 = por %p98, %p99
      %p101 = scmp.ne.s32.totalorder %s93, %s95
      %p102 = scmp.eq.s32.totalorder %s24, 1
      %p103 = por %p101, %p102
      %p104 = scmp.ne.s32.totalorder %s95, %s96
      %p105 = scmp.eq.s32.totalorder %s24, 0
      %p106 = por %p104, %p105
      %p107 = scmp.ne.s32.totalorder %s95, %s96
      %p108 = scmp.eq.s32.totalorder %s25, 1
      %p109 = por %p107, %p108
      %p111 = scmp.ne.s32.totalorder %s96, %s110
      %p112 = scmp.eq.s32.totalorder %s25, 0
      %p113 = por %p111, %p112
      %s115 = sadd.s32 %s114, 1
      %p118 = scmp.eq.s32.totalorder %s19, 1
      %p119 = scmp.ne.s32.totalorder %s114, %s116
      %p120 = scmp.eq.s32.totalorder %s19, 0
      %p121 = por %p119, %p120
      %p122 = scmp.ne.s32.totalorder %s114, %s116
      %p123 = scmp.eq.s32.totalorder %s24, 1
      %p124 = por %p122, %p123
      %p125 = scmp.ne.s32.totalorder %s116, %s117
      %p126 = scmp.eq.s32.totalorder %s24, 0
      %p127 = por %p125, %p126
      %p128 = scmp.ne.s32.totalorder %s116, %s117
      %p129 = scmp.eq.s32.totalorder %s25, 1
      %p130 = por %p128, %p129
      %p132 = scmp.ne.s32.totalorder %s117, %s131
      %p133 = scmp.eq.s32.totalorder %s25, 0
      %p134 = por %p132, %p133
      %s135 = ssub.s32 %s26, %s38
      %s136 = ssub.s32 %s27, %s34
      %s137 = sor.u32 %s135, %s136
      %p138 = scmp.eq.s32.totalorder %s137, 0
      %s140 = sadd.s32 %s139, 1
      %s141 = scalar_select %p138, %s139, %s140
      %p144 = pneg %p138
      %p145 = scmp.eq.s32.totalorder %s19, 1
      %p146 = por %p144, %p145
      %p147 = scmp.ne.s32.totalorder %s139, %s142
      %p148 = scmp.eq.s32.totalorder %s19, 0
      %p149 = por %p147, %p148
      %p150 = scmp.ne.s32.totalorder %s139, %s142
      %p151 = scmp.eq.s32.totalorder %s24, 1
      %p152 = por %p150, %p151
      %p153 = scmp.ne.s32.totalorder %s142, %s143
      %p154 = scmp.eq.s32.totalorder %s24, 0
      %p155 = por %p153, %p154
      %p156 = scmp.ne.s32.totalorder %s142, %s143
      %p157 = scmp.eq.s32.totalorder %s25, 1
      %p158 = por %p156, %p157
      %p160 = scmp.ne.s32.totalorder %s143, %s159
      %p161 = scmp.eq.s32.totalorder %s25, 0
      %p162 = por %p160, %p161
      %p163 = scmp.le.s32.totalorder 1, %s19
      %p164 = scmp.lt.s32.totalorder %s19, 3
      %p165 = pnand %p163, %p164
      %p166 = pneg %p165
      // Predicated region
      $region9: #{tpu_custom_call.1} parent=5 // pred_check
        _
      $region10: #{tpu_custom_call.1} parent=5 // pred_check_branch
        %168 = sbr.rel (%p165) target = $region12
      $region11: #{tpu_custom_call.1} parent=5 // pred_region
        %s169 = ssub.s32 %s19, 1
        // Predicated region
        $region13: #{tpu_custom_call.1} parent=11 // pred_check
          %p170 = pneg %p106
        $region14: #{tpu_custom_call.1} parent=11 // pred_check_branch
          %172 = sbr.rel (%p170) target = $region16
        $region15: #{tpu_custom_call.1} parent=11 // pred_region
          %s174 = ssub.s32 768, 768
          %175 = vsyncadd [#allocation8], %s174
          %s176 = sshll.u32 [#allocation9], 4
          %s177 = int_to_ptr.vmem [resolvable:$true] %s176
          %182 = dma.hbm_to_vmem [thread:$0]  %s2, 768, %s177, [#allocation8], 192, 192, 12
        $region16: #{tpu_custom_call.1} parent=11 // pred_fallthru
          _
        // Predicated region
        $region17: #{tpu_custom_call.1} parent=11 // pred_check
          %p183 = pneg %p127
        $region18: #{tpu_custom_call.1} parent=11 // pred_check_branch
          %185 = sbr.rel (%p183) target = $region20
        $region19: #{tpu_custom_call.1} parent=11 // pred_region
          _
        $region20: #{tpu_custom_call.1} parent=11 // pred_fallthru
          _
      $region12: #{tpu_custom_call.1} parent=5 // pred_fallthru
        _
      %p186 = scmp.lt.s32.totalorder %s19, 2
      // Predicated region
      $region21: #{tpu_custom_call.1} parent=5 // pred_check
        %p187 = pneg %p186
      $region22: #{tpu_custom_call.1} parent=5 // pred_check_branch
        %189 = sbr.rel (%p187) target = $region24
      $region23: #{tpu_custom_call.1} parent=5 // pred_region
        // Predicated region
        $region25: #{tpu_custom_call.1} parent=23 // pred_check
          %p190 = pneg %p53
        $region26: #{tpu_custom_call.1} parent=23 // pred_check_branch
          %192 = sbr.rel (%p190) target = $region28
        $region27: #{tpu_custom_call.1} parent=23 // pred_region
          %s193 = sand.u32 %s43, 1
          %s194 = scalar_lea.sflag [#allocation5], %s193
          %s195 = sand.u32 %s43, 1
          %s196 = smul.addr %s195, 4
          %s197 = scalar_lea.vmem [#allocation4], %s196
          %s199 = ssub.s32 64, 64
          %200 = vsyncadd %s194, %s199
          %s201 = sadd.s32 %s27, %s26
          %s202 = smul.addr %s201, 64
          %s203 = scalar_lea.hbm %s0, %s202
          %s205 = sshll.u32 %s197, 4
          %s206 = int_to_ptr.vmem [resolvable:$true] %s205
          %208 = dma.hbm_to_vmem [thread:$0]  %s203, 64, %s206, %s194
        $region28: #{tpu_custom_call.1} parent=23 // pred_fallthru
          _
        // Predicated region
        $region29: #{tpu_custom_call.1} parent=23 // pred_check
          %p209 = pneg %p79
        $region30: #{tpu_custom_call.1} parent=23 // pred_check_branch
          %211 = sbr.rel (%p209) target = $region32
        $region31: #{tpu_custom_call.1} parent=23 // pred_region
          %s212 = sand.u32 %s19, 1
          %s213 = scalar_lea.sflag [#allocation8], %s212
          %s214 = sand.u32 %s69, 1
          %s215 = smul.addr %s214, 4
          %s216 = scalar_lea.vmem [#allocation7], %s215
          %s218 = ssub.s32 64, 64
          %219 = vsyncadd %s213, %s218
          %s220 = smul.addr %s26, 64
          %s221 = scalar_lea.hbm %s1, %s220
          %s223 = sshll.u32 %s216, 4
          %s224 = int_to_ptr.vmem [resolvable:$true] %s223
          %226 = dma.hbm_to_vmem [thread:$0]  %s221, 64, %s224, %s213
        $region32: #{tpu_custom_call.1} parent=23 // pred_fallthru
          _
      $region24: #{tpu_custom_call.1} parent=5 // pred_fallthru
        _
      %p227 = scmp.le.s32.totalorder 1, %s19
      %p228 = scmp.lt.s32.totalorder %s19, 3
      %p229 = pnand %p227, %p228
      %p230 = pneg %p229
      // Predicated region
      $region33: #{tpu_custom_call.1} parent=5 // pred_check
        _
      $region34: #{tpu_custom_call.1} parent=5 // pred_check_branch
        %232 = sbr.rel (%p229) target = $region36
      $region35: #{tpu_custom_call.1} parent=5 // pred_region
        %s233 = ssub.s32 %s19, 1
        %s234 = sand.u32 %s46, 1
        %s235 = scalar_lea.sflag [#allocation5], %s234
        %s236 = sand.u32 %s46, 1
        %s237 = smul.addr %s236, 4
        %s238 = scalar_lea.vmem [#allocation4], %s237
        // Predicated region
        $region37: #{tpu_custom_call.1} parent=35 // pred_check
          %p239 = pneg %p59
        $region38: #{tpu_custom_call.1} parent=35 // pred_check_branch
          %241 = sbr.rel (%p239) target = $region40
        $region39: #{tpu_custom_call.1} parent=35 // pred_region
          %242 = dma.done %s235, 64
        $region40: #{tpu_custom_call.1} parent=35 // pred_fallthru
          _
        %s243 = sand.u32 %s24, 1
        %s244 = scalar_lea.sflag [#allocation8], %s243
        %s245 = sand.u32 %s72, 1
        %s246 = smul.addr %s245, 4
        %s247 = scalar_lea.vmem [#allocation7], %s246
        // Predicated region
        $region41: #{tpu_custom_call.1} parent=35 // pred_check
          %p248 = pneg %p85
        $region42: #{tpu_custom_call.1} parent=35 // pred_check_branch
          %250 = sbr.rel (%p248) target = $region44
        $region43: #{tpu_custom_call.1} parent=35 // pred_region
          %251 = dma.done %s244, 64
        $region44: #{tpu_custom_call.1} parent=35 // pred_fallthru
          _
        // Predicated region
        $region45: #{tpu_custom_call.1} parent=35 // pred_check
          %p252 = pneg %p106
        $region46: #{tpu_custom_call.1} parent=35 // pred_check_branch
          %254 = sbr.rel (%p252) target = $region48
        $region47: #{tpu_custom_call.1} parent=35 // pred_region
          %255 = dma.done [#allocation8], 768
        $region48: #{tpu_custom_call.1} parent=35 // pred_fallthru
          _
        %s256 = sand.u32 %s46, 1
        %s257 = scalar_lea.sflag [#allocation5], %s256
        %s258 = sand.u32 %s46, 1
        %s259 = smul.addr %s258, 4
        %s260 = scalar_lea.vmem [#allocation4], %s259
        %p261 = pneg %p59
        %p262 = pneg %p56
        %s263 = sand.u32 %s24, 1
        %s264 = scalar_lea.sflag [#allocation8], %s263
        %s265 = sand.u32 %s72, 1
        %s266 = smul.addr %s265, 4
        %s267 = scalar_lea.vmem [#allocation7], %s266
        %p268 = pneg %p85
        %p269 = pneg %p82
        %p270 = pneg %p106
        %p271 = pneg %p103
        %p272 = pneg %p127
        %p273 = pneg %p124
        %p274 = pneg %p155
        %p275 = pneg %p152
        %s276 = sand.u32 %s142, 1
        %s277 = scalar_lea.sflag [#allocation6], %s276
        %s278 = sand.u32 %s142, 1
        %s279 = smul.addr %s278, 8
        %s280 = scalar_lea.vmem [#allocation10], %s279
        %p282 = scmp.eq.s32.totalorder %s29, 0
        // Predicated region
        $region49: #{tpu_custom_call.1} parent=35 // pred_check
          %p283 = pneg %p282
        $region50: #{tpu_custom_call.1} parent=35 // pred_check_branch
          %285 = sbr.rel (%p283) target = $region52
        $region51: #{tpu_custom_call.1} parent=35 // pred_region
          %v286 = vld [vmem:[%s247] sm:$0xf]
          %v287 = vld [vmem:[#allocation9 + $0x4] sm:$0xff]
          %v288 = vld [vmem:[#allocation9 + $0x10] sm:$0xff]
          %v289 = vld [vmem:[#allocation9 + $0x1c] sm:$0xff]
          %v290 = vld [vmem:[#allocation9 + $0x28] sm:$0xff]
          %v291 = vld [vmem:[%s3 + $0x1] sm:$0x3]
          %v293 = vlaneseq
          %v294 = vshrl.u32 %v293, 7
          %v295 = vsub.s32 0, %v294
          %v296 = vrot.slane %v291, %v295
          %v297 = vlaneseq
          %v298 = vshrl.u32 %v297, 7
          %v299 = vsub.s32 1, %v298
          %v300 = vrot.slane %v291, %v299
          %v307 = vunpack.c.l.b16 %v287
          %v308 = vunpack.c.h.b16 %v287
          %v309 = vunpack.c.l.b16 %v288
          %v310 = vunpack.c.h.b16 %v288
          %v311 = vunpack.c.l.b16 %v289
          %v312 = vunpack.c.h.b16 %v289
          %v313 = vunpack.c.l.b16 %v290
          %v314 = vunpack.c.h.b16 %v290
          %v315 = vpack.c.b16 %v309, %v307
          %v316 = vpack.c.b16 %v310, %v308
          %v317 = vpack.c.b16 %v313, %v311
          %v318 = vpack.c.b16 %v314, %v312
          %vm323 = vcmask 261120
          %v325 = vsel %vm323, %v286, 0
          %327 = vmatprep.subr.bf16.mxu0 %v316
          %328 = vmatpush1.bf16.msra.mxu0 %v315
          %329 = vmatprep.subr.bf16.mxu0 %v318
          %330 = vmatpush1.bf16.msra.mxu0 %v317
          %331 = vmatprep.subr.bf16.mxu0 0
          %332 = vmatpush1.bf16.msra.mxu0 0
          %333 = vmatprep.subr.bf16.mxu0 0
          %334 = vmatpush1.bf16.msra.mxu0 0
          %335 = vmatprep.subr.bf16.mxu0 0
          %336 = vmatpush1.bf16.msra.mxu0 0
          %337 = vmatprep.subr.bf16.mxu0 0
          %338 = vmatpush1.bf16.msra.mxu0 0
          %339 = vmatprep.subr.bf16.mxu0 0
          %340 = vmatpush1.bf16.msra.mxu0 0
          %341 = vmatprep.subr.bf16.mxu0 0
          %342 = vmatpush1.bf16.msra.mxu0 0
          %343 = vmatprep.subr.bf16.mxu0 0
          %344 = vmatpush1.bf16.msra.mxu0 0
          %345 = vmatprep.subr.bf16.mxu0 0
          %346 = vmatpush1.bf16.msra.mxu0 0
          %347 = vmatprep.subr.bf16.mxu0 0
          %348 = vmatpush1.bf16.msra.mxu0 0
          %349 = vmatprep.subr.bf16.mxu0 0
          %350 = vmatpush1.bf16.msra.mxu0 0
          %351 = vmatprep.subr.bf16.mxu0 0
          %352 = vmatpush1.bf16.msra.mxu0 0
          %353 = vmatprep.subr.bf16.mxu0 0
          %354 = vmatpush1.bf16.msra.mxu0 0
          %355 = vmatprep.subr.bf16.mxu0 0
          %356 = vmatpush1.bf16.msra.mxu0 0
          %357 = vmatprep.subr.bf16.mxu0 0
          %358 = vmatpush1.bf16.msra.mxu0 0
          %359 = vmatprep.mubr.bf16.mxu0 0
          %360 = vmatmul.mubr.bf16.gmra.mrb[0].mxu0 %v325
          %v361 = vpop.f32.mrb[0].mxu0
          %v362 = vadd.f32 %v296, %v361
          %v363 = vpop.f32.mrb[0].mxu0
          %v364 = vadd.f32 %v300, %v363
          %v365 = vpop.f32.mrb[0].mxu0
          %v366 = vpop.f32.mrb[0].mxu0
          %367 = vdwg.mxu0
          %368 = vxpose.xlu0.b32.start [1/16] %v362, 128
          %369 = vxpose.xlu0.b32.cont [2/16] 0.0, 128
          %370 = vxpose.xlu0.b32.cont [3/16] 0.0, 128
          %371 = vxpose.xlu0.b32.cont [4/16] 0.0, 128
          %372 = vxpose.xlu0.b32.cont [5/16] 0.0, 128
          %373 = vxpose.xlu0.b32.cont [6/16] 0.0, 128
          %374 = vxpose.xlu0.b32.cont [7/16] 0.0, 128
          %375 = vxpose.xlu0.b32.cont [8/16] 0.0, 128
          %376 = vxpose.xlu0.b32.cont [9/16] 0.0, 128
          %377 = vxpose.xlu0.b32.cont [10/16] 0.0, 128
          %378 = vxpose.xlu0.b32.cont [11/16] 0.0, 128
          %379 = vxpose.xlu0.b32.cont [12/16] 0.0, 128
          %380 = vxpose.xlu0.b32.cont [13/16] 0.0, 128
          %381 = vxpose.xlu0.b32.cont [14/16] 0.0, 128
          %382 = vxpose.xlu0.b32.cont [15/16] 0.0, 128
          %383 = vxpose.xlu0.b32.end [16/16] 0.0, 128
          %v384 = vpop.trf.xlu0
          %v385 = vpop.trf.xlu0
          %v386 = vpop.trf.xlu0
          %v387 = vpop.trf.xlu0
          %v388 = vpop.trf.xlu0
          %v389 = vpop.trf.xlu0
          %v390 = vpop.trf.xlu0
          %v391 = vpop.trf.xlu0
          %v392 = vpop.trf.xlu0
          %v393 = vpop.trf.xlu0
          %v394 = vpop.trf.xlu0
          %v395 = vpop.trf.xlu0
          %v396 = vpop.trf.xlu0
          %v397 = vpop.trf.xlu0
          %v398 = vpop.trf.xlu0
          %v399 = vpop.trf.xlu0
          %v400 = vpack.c.bf16 %v385, %v384
          %v401 = vpack.c.bf16 %v387, %v386
          %v402 = vpack.c.bf16 %v389, %v388
          %v403 = vpack.c.bf16 %v391, %v390
          %v404 = vpack.c.bf16 %v393, %v392
          %v405 = vpack.c.bf16 %v395, %v394
          %v406 = vpack.c.bf16 %v397, %v396
          %v407 = vpack.c.bf16 %v399, %v398
          %vm408 = vcmask 64512
          %409 = vst.msk [vmem:[#allocation2] sm:$0xff] %vm408, %v400
          %410 = vst.msk [vmem:[#allocation2 + $0x8] sm:$0xff] %vm408, %v401
          %411 = vst.msk [vmem:[#allocation2 + $0x10] sm:$0xff] %vm408, %v402
          %412 = vst.msk [vmem:[#allocation2 + $0x18] sm:$0xff] %vm408, %v403
          %413 = vst.msk [vmem:[#allocation2 + $0x20] sm:$0xff] %vm408, %v404
          %414 = vst.msk [vmem:[#allocation2 + $0x28] sm:$0xff] %vm408, %v405
          %415 = vst.msk [vmem:[#allocation2 + $0x30] sm:$0xff] %vm408, %v406
          %416 = vst.msk [vmem:[#allocation2 + $0x38] sm:$0xff] %vm408, %v407
          %v417 = vpack.c.bf16 %v364, %v364
          %418 = vst [vmem:[#allocation3] sm:$0xf] %v417
        $region52: #{tpu_custom_call.1} parent=35 // pred_fallthru
          _
        %v419 = vld [vmem:[%s238] sm:$0xf]
        %v420 = vld [vmem:[#allocation9] sm:$0xf]
        %v421 = vld [vmem:[#allocation9 + $0xc] sm:$0xf]
        %v422 = vld [vmem:[#allocation9 + $0x18] sm:$0xf]
        %v423 = vld [vmem:[#allocation9 + $0x24] sm:$0xf]
        %v424 = vld [vmem:[%s3] sm:$0x1]
        %v426 = vlaneseq
        %v427 = vshrl.u32 %v426, 7
        %v428 = vsub.s32 0, %v427
        %v429 = vrot.slane %v424, %v428
        %v435 = vunpack.c.l.b16 %v420
        %v436 = vunpack.c.l.b16 %v421
        %v437 = vunpack.c.l.b16 %v422
        %v438 = vunpack.c.l.b16 %v423
        %v439 = vpack.c.b16 %v436, %v435
        %v440 = vpack.c.b16 %v438, %v437
        %vm443 = vcmask 261120
        %v445 = vsel %vm443, %v419, 0
        %447 = vmatprep.subr.bf16.mxu0 0
        %448 = vmatpush1.bf16.msra.mxu0 %v439
        %449 = vmatprep.subr.bf16.mxu0 0
        %450 = vmatpush1.bf16.msra.mxu0 %v440
        %451 = vmatprep.subr.bf16.mxu0 0
        %452 = vmatpush1.bf16.msra.mxu0 0
        %453 = vmatprep.subr.bf16.mxu0 0
        %454 = vmatpush1.bf16.msra.mxu0 0
        %455 = vmatprep.subr.bf16.mxu0 0
        %456 = vmatpush1.bf16.msra.mxu0 0
        %457 = vmatprep.subr.bf16.mxu0 0
        %458 = vmatpush1.bf16.msra.mxu0 0
        %459 = vmatprep.subr.bf16.mxu0 0
        %460 = vmatpush1.bf16.msra.mxu0 0
        %461 = vmatprep.subr.bf16.mxu0 0
        %462 = vmatpush1.bf16.msra.mxu0 0
        %463 = vmatprep.subr.bf16.mxu0 0
        %464 = vmatpush1.bf16.msra.mxu0 0
        %465 = vmatprep.subr.bf16.mxu0 0
        %466 = vmatpush1.bf16.msra.mxu0 0
        %467 = vmatprep.subr.bf16.mxu0 0
        %468 = vmatpush1.bf16.msra.mxu0 0
        %469 = vmatprep.subr.bf16.mxu0 0
        %470 = vmatpush1.bf16.msra.mxu0 0
        %471 = vmatprep.subr.bf16.mxu0 0
        %472 = vmatpush1.bf16.msra.mxu0 0
        %473 = vmatprep.subr.bf16.mxu0 0
        %474 = vmatpush1.bf16.msra.mxu0 0
        %475 = vmatprep.subr.bf16.mxu0 0
        %476 = vmatpush1.bf16.msra.mxu0 0
        %477 = vmatprep.subr.bf16.mxu0 0
        %478 = vmatpush1.bf16.msra.mxu0 0
        %479 = vmatprep.mubr.bf16.mxu0 0
        %480 = vmatmul.mubr.bf16.gmra.mrb[0].mxu0 %v445
        %v481 = vpop.f32.mrb[0].mxu0
        %v482 = vadd.f32 %v429, %v481
        %v483 = vpop.f32.mrb[0].mxu0
        %v484 = vpop.f32.mrb[0].mxu0
        %v485 = vpop.f32.mrb[0].mxu0
        %486 = vdwg.mxu0
        %v487 = vmul.f32 %v482, 0.17677669
        %v488 = vpack.c.bf16 %v487, %v487
        %v489 = vld [vmem:[#allocation2] sm:$0xff]
        %v490 = vld [vmem:[#allocation2 + $0x8] sm:$0xff]
        %v491 = vld [vmem:[#allocation2 + $0x10] sm:$0xff]
        %v492 = vld [vmem:[#allocation2 + $0x18] sm:$0xff]
        %v493 = vld [vmem:[#allocation2 + $0x20] sm:$0xff]
        %v494 = vld [vmem:[#allocation2 + $0x28] sm:$0xff]
        %v495 = vld [vmem:[#allocation2 + $0x30] sm:$0xff]
        %v496 = vld [vmem:[#allocation2 + $0x38] sm:$0xff]
        %497 = vmatprep.subr.bf16.mxu0 0
        %498 = vmatpush1.bf16.msra.mxu0 %v489
        %499 = vmatprep.subr.bf16.mxu0 0
        %500 = vmatpush1.bf16.msra.mxu0 %v490
        %501 = vmatprep.subr.bf16.mxu0 0
        %502 = vmatpush1.bf16.msra.mxu0 %v491
        %503 = vmatprep.subr.bf16.mxu0 0
        %504 = vmatpush1.bf16.msra.mxu0 %v492
        %505 = vmatprep.subr.bf16.mxu0 0
        %506 = vmatpush1.bf16.msra.mxu0 %v493
        %507 = vmatprep.subr.bf16.mxu0 0
        %508 = vmatpush1.bf16.msra.mxu0 %v494
        %509 = vmatprep.subr.bf16.mxu0 0
        %510 = vmatpush1.bf16.msra.mxu0 %v495
        %511 = vmatprep.subr.bf16.mxu0 0
        %512 = vmatpush1.bf16.msra.mxu0 %v496
        %513 = vmatprep.subr.bf16.mxu0 0
        %514 = vmatpush1.bf16.msra.mxu0 0
        %515 = vmatprep.subr.bf16.mxu0 0
        %516 = vmatpush1.bf16.msra.mxu0 0
        %517 = vmatprep.subr.bf16.mxu0 0
        %518 = vmatpush1.bf16.msra.mxu0 0
        %519 = vmatprep.subr.bf16.mxu0 0
        %520 = vmatpush1.bf16.msra.mxu0 0
        %521 = vmatprep.subr.bf16.mxu0 0
        %522 = vmatpush1.bf16.msra.mxu0 0
        %523 = vmatprep.subr.bf16.mxu0 0
        %524 = vmatpush1.bf16.msra.mxu0 0
        %525 = vmatprep.subr.bf16.mxu0 0
        %526 = vmatpush1.bf16.msra.mxu0 0
        %527 = vmatprep.subr.bf16.mxu0 0
        %528 = vmatpush1.bf16.msra.mxu0 0
        %529 = vmatprep.mubr.bf16.mxu0 0
        %530 = vmatmul.mubr.bf16.gmra.mrb[0].mxu0 %v488
        %v531 = vpop.f32.mrb[0].mxu0
        %v532 = vadd.f32 0.0, %v531
        %v533 = vpop.f32.mrb[0].mxu0
        %v534 = vpop.f32.mrb[0].mxu0
        %v535 = vpop.f32.mrb[0].mxu0
        %536 = vdwg.mxu0
        %vm537 = vcmask 64512
        %v538 = vsel %vm537, %v532, -inf
        %539 = vmax.xlane.f32.xlu0 %v538
        %v540 = vpop.xlane.xlu0 %539
        %v541 = vsub.f32 %v532, %v540
        %v542 = vmul.f32 %v541, 1.442695
        %v543 = vpow.pop %v542
        %v544 = vsel %vm537, %v543, 0.0
        %545 = vadd.xlane.f32.xlu0 %v544
        %v546 = vpop.xlane.xlu0 %545
        %v547 = vrcp.pop %v546
        %v548 = vmul.f32 %v543, %v547
        %v549 = vpack.c.bf16 %v548, %v548
        %v550 = vld [vmem:[#allocation3] sm:$0xf]
        %v552 = vsel %vm537, %v549, 0
        %vm554 = vcmask 1043456
        %v556 = vsel %vm554, %v550, 0
        %558 = vmatprep.subr.bf16.mxu0 0
        %559 = vmatpush1.bf16.msra.mxu0 %v556
        %560 = vmatprep.subr.bf16.mxu0 0
        %561 = vmatpush1.bf16.msra.mxu0 0
        %562 = vmatprep.subr.bf16.mxu0 0
        %563 = vmatpush1.bf16.msra.mxu0 0
        %564 = vmatprep.subr.bf16.mxu0 0
        %565 = vmatpush1.bf16.msra.mxu0 0
        %566 = vmatprep.subr.bf16.mxu0 0
        %567 = vmatpush1.bf16.msra.mxu0 0
        %568 = vmatprep.subr.bf16.mxu0 0
        %569 = vmatpush1.bf16.msra.mxu0 0
        %570 = vmatprep.subr.bf16.mxu0 0
        %571 = vmatpush1.bf16.msra.mxu0 0
        %572 = vmatprep.subr.bf16.mxu0 0
        %573 = vmatpush1.bf16.msra.mxu0 0
        %574 = vmatprep.subr.bf16.mxu0 0
        %575 = vmatpush1.bf16.msra.mxu0 0
        %576 = vmatprep.subr.bf16.mxu0 0
        %577 = vmatpush1.bf16.msra.mxu0 0
        %578 = vmatprep.subr.bf16.mxu0 0
        %579 = vmatpush1.bf16.msra.mxu0 0
        %580 = vmatprep.subr.bf16.mxu0 0
        %581 = vmatpush1.bf16.msra.mxu0 0
        %582 = vmatprep.subr.bf16.mxu0 0
        %583 = vmatpush1.bf16.msra.mxu0 0
        %584 = vmatprep.subr.bf16.mxu0 0
        %585 = vmatpush1.bf16.msra.mxu0 0
        %586 = vmatprep.subr.bf16.mxu0 0
        %587 = vmatpush1.bf16.msra.mxu0 0
        %588 = vmatprep.subr.bf16.mxu0 0
        %589 = vmatpush1.bf16.msra.mxu0 0
        %590 = vmatprep.mubr.bf16.mxu0 0
        %591 = vmatmul.mubr.bf16.gmra.mrb[0].mxu0 %v552
        %v592 = vpop.f32.mrb[0].mxu0
        %v593 = vadd.f32 0.0, %v592
        %v594 = vpop.f32.mrb[0].mxu0
        %v595 = vpop.f32.mrb[0].mxu0
        %v596 = vpop.f32.mrb[0].mxu0
        %597 = vdwg.mxu0
        %598 = vst [vmem:[%s280] sm:$0xff] %v593
        %s599 = sand.u32 %s142, 1
        %s600 = scalar_lea.sflag [#allocation6], %s599
        %s601 = sand.u32 %s142, 1
        %s602 = smul.addr %s601, 8
        %s603 = scalar_lea.vmem [#allocation10], %s602
        // Predicated region
        $region53: #{tpu_custom_call.1} parent=35 // pred_check
          %p604 = pneg %p152
        $region54: #{tpu_custom_call.1} parent=35 // pred_check_branch
          %606 = sbr.rel (%p604) target = $region56
        $region55: #{tpu_custom_call.1} parent=35 // pred_region
          %s608 = ssub.s32 128, 128
          %609 = vsyncadd %s600, %s608
          %s610 = sadd.s32 %s29, %s28
          %s611 = smul.addr %s610, 128
          %s612 = scalar_lea.hbm %s4, %s611
          %s614 = sshll.u32 %s603, 4
          %s615 = int_to_ptr.vmem [resolvable:$true] %s614
          %617 = dma.vmem_to_hbm [thread:$0]  %s615, 128, %s612, %s600
        $region56: #{tpu_custom_call.1} parent=35 // pred_fallthru
          _
      $region36: #{tpu_custom_call.1} parent=5 // pred_fallthru
        _
      %p618 = scmp.le.s32.totalorder 2, %s19
      // Predicated region
      $region57: #{tpu_custom_call.1} parent=5 // pred_check
        %p619 = pneg %p618
      $region58: #{tpu_custom_call.1} parent=5 // pred_check_branch
        %621 = sbr.rel (%p619) target = $region60
      $region59: #{tpu_custom_call.1} parent=5 // pred_region
        %s622 = ssub.s32 %s19, 2
        // Predicated region
        $region61: #{tpu_custom_call.1} parent=59 // pred_check
          %p623 = pneg %p158
        $region62: #{tpu_custom_call.1} parent=59 // pred_check_branch
          %625 = sbr.rel (%p623) target = $region64
        $region63: #{tpu_custom_call.1} parent=59 // pred_region
          %s626 = sand.u32 %s143, 1
          %s627 = scalar_lea.sflag [#allocation6], %s626
          %s628 = sand.u32 %s143, 1
          %s629 = smul.addr %s628, 8
          %s630 = scalar_lea.vmem [#allocation10], %s629
          %631 = dma.done %s627, 128
        $region64: #{tpu_custom_call.1} parent=59 // pred_fallthru
          _
      $region60: #{tpu_custom_call.1} parent=5 // pred_fallthru
        _
    $region6: #{tpu_custom_call.1} parent=1 // loop_footer
      %s23 = sadd.s32 1, %s19
    $region7: #{tpu_custom_call.1} parent=1 // loop_footer_branch
      %18 = sbr.rel target = $region3
    $region8: #{tpu_custom_call.1} parent=1 // loop_exit
      _
    %632 = vsyncpa [#allocation5], 1
    %s633 = scalar_lea.sflag [#allocation5], 1
    %634 = vsyncpa %s633, 1
    %635 = vsyncpa [#allocation8], 1
    %s636 = scalar_lea.sflag [#allocation8], 1
    %637 = vsyncpa %s636, 1
    %638 = vsyncpa [#allocation6], 1
    %s639 = scalar_lea.sflag [#allocation6], 1
    %640 = vsyncpa %s639, 1

</llo_original>
